<compile_context>
chip_gen: v5e
topology: v5e:2x2
jax: 0.10.0
libtpu: 0.0.40
codegen_flags: <defaults>
</compile_context>

<pallas_src>
import functools
import math

import jax
import jax.numpy as jnp
from jax import lax
from jax.experimental import pallas as pl
from jax.experimental.pallas import tpu as pltpu


_LANES = 128
_VMEM_TILE_BUDGET = 12 * 1024 * 1024   # double-buffered tile budget (all gens)
_VMEM_LIMIT_BYTES = 32 * 1024 * 1024   # scoped VMEM request; safe on v5e/v6e/v7x
_SMALL_OUTPUT_BYTES = 1 << 20          # below this, fused pure JAX wins


def _round_up(x: int, m: int) -> int:
    return ((x + m - 1) // m) * m


def _column_tables(dim: int, max_period: float):
    """Per-output-column (freq, phase): out[:, c] = sin(t * freq[c] + phase[c]).

    cos(x) == sin(x + pi/2); an odd-dim zero-pad column is freq=0, phase=0.
    """
    half = dim // 2
    base = jnp.exp(jnp.arange(half, dtype=jnp.float32)
                   * (-math.log(float(max_period)) / half))
    freqs = jnp.concatenate([base, base])
    phase = jnp.concatenate([jnp.full((half,), 0.5 * math.pi, jnp.float32),
                             jnp.zeros((half,), jnp.float32)])
    if dim % 2:
        pad = jnp.zeros((1,), jnp.float32)
        freqs = jnp.concatenate([freqs, pad])
        phase = jnp.concatenate([phase, pad])
    return freqs, phase


def _pos_emb_kernel(t_ref, tab_ref, o_ref, *, k: int):
    """One (TN, k*dim) output block: sin(t_expanded * freq + phase)."""
    freqs = tab_ref[0:1, :]          # (1, k*dim) f32
    phase = tab_ref[1:2, :]          # (1, k*dim) f32
    t = t_ref[...]                   # (TN, k)    f32
    if k == 1:
        args = t * freqs + phase                     # plain broadcast, dim >= 128
    else:
        # Lane expansion via a 0/1 matmul on the idle MXU. HIGHEST precision so
        # f32 t values survive the bf16 pass decomposition exactly enough.
        expand = tab_ref[2:2 + k, :]                 # (k, k*dim) 0/1
        t_rep = jnp.dot(t, expand,
                        preferred_element_type=jnp.float32,
                        precision=lax.Precision.HIGHEST)
        args = t_rep * freqs + phase
    o_ref[...] = jnp.sin(args).astype(o_ref.dtype)


def unlearned_sinusoidal_pos_emb(timesteps: jax.Array, dim: int,
                                 max_period: float = 10000.0, *,
                                 out_dtype=None,
                                 use_pallas=None) -> jax.Array:
    """JAX/Pallas equivalent of UnLearnedSinusoidalPosEmb.forward.

    timesteps: 1-D [N] array (may be fractional).  Returns [N, dim].
    out_dtype: optional reduced-precision output (e.g. jnp.bfloat16); math is f32.
    use_pallas: None = auto size-based dispatch; True/False to force a path.
    """
    assert timesteps.ndim == 1, "timesteps must be a 1-D tensor of N indices"
    assert dim >= 2, "dim must be >= 2"
    n = timesteps.shape[0]

    if out_dtype is None:
        out_dtype = (timesteps.dtype
                     if jnp.issubdtype(timesteps.dtype, jnp.floating)
                     else jnp.float32)
    out_dtype = jnp.dtype(out_dtype)
    assert jnp.issubdtype(out_dtype, jnp.floating)

    freq_cols, phase_cols = _column_tables(dim, max_period)
    t_f32 = timesteps.astype(jnp.float32)

    out_bytes = n * dim * out_dtype.itemsize
    if use_pallas is None:
        use_pallas = out_bytes >= _SMALL_OUTPUT_BYTES
    if not use_pallas:
        # Tiny problem: fused XLA elementwise op beats the custom-call launch.
        args = t_f32[:, None] * freq_cols[None, :] + phase_cols[None, :]
        return jnp.sin(args).astype(out_dtype)

    # ---- lane-dense packing: k logical rows per 128-lane output row ---------
    k = max(1, _LANES // dim)
    packed = k * dim
    n_pad = _round_up(n, k)
    n_packed = n_pad // k
    if n_pad > n:
        t_f32 = jnp.concatenate(
            [t_f32, jnp.zeros((n_pad - n,), jnp.float32)])
    t_packed = t_f32.reshape(n_packed, k)

    freqs = jnp.tile(freq_cols, k).reshape(1, packed)
    phase = jnp.tile(phase_cols, k).reshape(1, packed)
    if k == 1:
        table = jnp.concatenate([freqs, phase], axis=0)              # (2, dim)
    else:
        expand = jnp.repeat(jnp.eye(k, dtype=jnp.float32), dim, axis=1)
        table = jnp.concatenate([freqs, phase, expand], axis=0)      # (2+k, packed)

    # ---- byte-budget-driven row tile ----------------------------------------
    row_align = 16 if out_dtype.itemsize == 2 else 8
    out_row_vmem = _round_up(packed, _LANES) * out_dtype.itemsize
    t_row_vmem = _LANES * 4          # (TN, k) f32 block lane-pads to 128 lanes
    per_row = 2 * (out_row_vmem + t_row_vmem)        # double-buffered in + out
    tn = max(row_align,
             (_VMEM_TILE_BUDGET // per_row) // row_align * row_align)
    # Keep >= 2 grid steps when there is enough work so the "parallel" axis can
    # shard across both v7x TensorCores.
    tn = min(tn, _round_up(pl.cdiv(n_packed, 2), row_align))
    tn = min(tn, _round_up(n_packed, row_align))
    grid = (pl.cdiv(n_packed, tn),)

    cost = pl.CostEstimate(
        flops=(2 + (2 * k if k > 1 else 0)) * n_pad * dim,
        transcendentals=n_pad * dim,
        bytes_accessed=(n_pad * dim * out_dtype.itemsize
                        + n_pad * 4 + int(table.size) * 4),
    )

    out_packed = pl.pallas_call(
        functools.partial(_pos_emb_kernel, k=k),
        out_shape=jax.ShapeDtypeStruct((n_packed, packed), out_dtype),
        grid=grid,
        in_specs=[
            pl.BlockSpec((tn, k), lambda i: (i, 0)),
            pl.BlockSpec(table.shape, lambda i: (0, 0)),   # constant, not re-DMA'd
        ],
        out_specs=pl.BlockSpec((tn, packed), lambda i: (i, 0)),
        compiler_params=pltpu.CompilerParams(
            dimension_semantics=("parallel",),
            vmem_limit_bytes=_VMEM_LIMIT_BYTES,
        ),
        cost_estimate=cost,
    )(t_packed, table)

    out = out_packed.reshape(n_pad, dim)   # free: contiguous row-major reinterpret
    return out[:n] if n_pad > n else out


def _reference(timesteps: jax.Array, dim: int, max_period: float = 10000.0):
    """Pure-JAX reference mirroring the PyTorch forward."""
    half = dim // 2
    dtype = (timesteps.dtype if jnp.issubdtype(timesteps.dtype, jnp.floating)
             else jnp.float32)
    freqs = jnp.exp(
        -math.log(float(max_period)) * jnp.arange(half, dtype=jnp.float32) / half)
    args = (timesteps[:, None].astype(jnp.float32) * freqs[None]).astype(dtype)
    emb = jnp.concatenate([jnp.cos(args), jnp.sin(args)], axis=-1)
    if dim % 2:
        emb = jnp.concatenate([emb, jnp.zeros_like(emb[:, :1])], axis=-1)
    return emb


if __name__ == "__main__":
    key = jax.random.PRNGKey(0)
    MAX_PERIOD = 10000

    # (n, dim, out_dtype, use_pallas, atol) — small shapes consistent with the
    # module (N diffusion timesteps, dim-wide embedding).
    cases = [
        (64,   32,  None,         True,  1e-3),  # dim<128: lane-packed, k=4
        (50,   33,  None,         True,  1e-3),  # odd dim + row padding, k=3
        (2000, 128, None,         True,  1e-3),  # k=1 broadcast path, 2 grid steps
        (128,  64,  jnp.bfloat16, True,  2e-2),  # bf16 writeback path, k=2
        (16,   32,  None,         None,  1e-3),  # auto-dispatch -> pure JAX
    ]

    for idx, (n, d, odt, force, atol) in enumerate(cases):
        t = jax.random.uniform(jax.random.fold_in(key, idx), (n,),
                               dtype=jnp.float32, minval=0.0, maxval=1000.0)
        out = jax.block_until_ready(
            unlearned_sinusoidal_pos_emb(t, d, MAX_PERIOD,
                                         out_dtype=odt, use_pallas=force))
        ref = _reference(t, d, MAX_PERIOD)
        expect_dtype = jnp.dtype(odt) if odt is not None else t.dtype
        assert out.shape == (n, d), (out.shape, (n, d))
        assert out.dtype == expect_dtype, (out.dtype, expect_dtype)
        err = jnp.max(jnp.abs(out.astype(jnp.float32) - ref.astype(jnp.float32)))
        assert err <= atol, f"case {(n, d, odt)}: max err {err}"

    print("KERNEL_OK")
</pallas_src>

<mosaic_0001>
module attributes {stable_mosaic.version = 11 : i64} {
  func.func @_pos_emb_kernel(%arg0: i32, %arg1: memref<8x4xf32, #tpu.memory_space<vmem>>, %arg2: memref<6x128xf32, #tpu.memory_space<vmem>>, %arg3: memref<8x128xf32, #tpu.memory_space<vmem>>) attributes {dimension_semantics = [#tpu.dimension_semantics<parallel>], iteration_bounds = array<i64: 2>, scalar_prefetch = 0 : i64, scratch_operands = 0 : i64, tpu.core_type = #tpu.core_type<tc>, window_params = [{transform_indices = @transform_0, window_bounds = array<i64: 8, 4>}, {pipeline_mode = #tpu.pipeline_mode<synchronous>, transform_indices = @transform_1, window_bounds = array<i64: 6, 128>}, {transform_indices = @transform_2, window_bounds = array<i64: 8, 128>}]} {
    %c0 = arith.constant 0 : index
    %c0_0 = arith.constant 0 : index
    %0 = vector.load %arg2[%c0, %c0_0] : memref<6x128xf32, #tpu.memory_space<vmem>>, vector<1x128xf32>
    %c1 = arith.constant 1 : index
    %c0_1 = arith.constant 0 : index
    %1 = vector.load %arg2[%c1, %c0_1] : memref<6x128xf32, #tpu.memory_space<vmem>>, vector<1x128xf32>
    %c0_2 = arith.constant 0 : index
    %c0_3 = arith.constant 0 : index
    %2 = vector.load %arg1[%c0_2, %c0_3] : memref<8x4xf32, #tpu.memory_space<vmem>>, vector<8x4xf32>
    %c2 = arith.constant 2 : index
    %c0_4 = arith.constant 0 : index
    %3 = vector.load %arg2[%c2, %c0_4] : memref<6x128xf32, #tpu.memory_space<vmem>>, vector<4x128xf32>
    %cst = arith.constant dense<0.000000e+00> : vector<8x128xf32>
    %4 = tpu.matmul %2, %3, %cst {dimension_numbers = #tpu.dot_dimension_numbers<[1], [0], [0], [1], [0, 0, 1, 1], [], []>, precision = #tpu.contract_precision<fp32>} : vector<8x4xf32>, vector<4x128xf32>, vector<8x128xf32> -> vector<8x128xf32>
    %5 = vector.broadcast %0 : vector<1x128xf32> to vector<8x128xf32>
    %6 = arith.mulf %4, %5 : vector<8x128xf32>
    %7 = vector.broadcast %1 : vector<1x128xf32> to vector<8x128xf32>
    %8 = arith.addf %6, %7 : vector<8x128xf32>
    %9 = math.sin %8 : vector<8x128xf32>
    %c0_5 = arith.constant 0 : index
    %c0_6 = arith.constant 0 : index
    %10 = vector.load %arg3[%c0_5, %c0_6] : memref<8x128xf32, #tpu.memory_space<vmem>>, vector<8x128xf32>
    tpu.vector_store %arg3[%c0_5, %c0_6], %9 {strides = array<i32>} : memref<8x128xf32, #tpu.memory_space<vmem>>, vector<8x128xf32>,
    return
  }
  func.func @transform_0(%arg0: i32) -> (i32, i32) {
    %c0_i32 = arith.constant 0 : i32
    %c0_i32_0 = arith.constant 0 : i32
    return %arg0, %c0_i32 : i32, i32
  }
  func.func @transform_1(%arg0: i32) -> (i32, i32) {
    %c0_i32 = arith.constant 0 : i32
    %c0_i32_0 = arith.constant 0 : i32
    %c0_i32_1 = arith.constant 0 : i32
    return %c0_i32, %c0_i32_0 : i32, i32
  }
  func.func @transform_2(%arg0: i32) -> (i32, i32) {
    %c0_i32 = arith.constant 0 : i32
    %c0_i32_0 = arith.constant 0 : i32
    return %arg0, %c0_i32 : i32, i32
  }
}

</mosaic_0001>

<llo_original>
// kernel: tpu_custom_call.1
$region0: #{tpu_custom_call.1}
  #allocation0 [shape = 'u32[]', space=smem, size = 0x4, offset = 0x4, fixed_abs, tag = 'smem constant byte address 0x4 - core index']
  #allocation1 [shape = 'u32[72,128]{1,0:T(1,128)}', space=vmem, size = 0x9000, scoped, tag = 'internal scratch']
  %s0 = inlined_call_operand.vmem [shape: f32[16,4], index: 0, kind: input, shape index: {}]
  %s1 = inlined_call_operand.vmem [shape: f32[6,128], index: 1, kind: input, shape index: {}]
  %s2 = inlined_call_operand.hbm [shape: f32[16,128], index: 2, kind: output, shape index: {}]
  %s3 = sld [smem:[#allocation0]]
  $region41: #{tpu_custom_call.1} parent=0
    _
  %s5 = ssub.s32 1, %s3
  %s6 = scalar_select 0, %s5, %s3
  $region1: #{tpu_custom_call.1} parent=0
    #allocation2 [shape = 'u8[8192]{0}', space=vmem, size = 0x2000, scoped, tag = 'output window, operand 0']
    #allocation3 [shape = 's32[2]{0}', space=sflag, size = 0x8, scoped, tag = 'scoped memory for tpu_custom_call.1']
    %7 = vsyncpa [#allocation3], 0
    %s8 = scalar_lea.sflag [#allocation3], 1
    %9 = vsyncpa %s8, 0
    loop: start=0, step=1, limit=4
    $region2: #{tpu_custom_call.1} parent=1 // loop_pre_header
      _
    $region3: #{tpu_custom_call.1} parent=1 // loop_header
      %s11 = sphi 0, %s15
      %p12 = scmp.ge.s32.totalorder %s11, 4
      %s21 = sphi 0, %s23
      %s24 = sphi 0, %s21
      %s25 = sphi 0, %s24
      %s41 = sphi 0, %s25
      %s45 = sphi 0, %s45
      %s47 = sphi 0, %s45
      %s48 = sphi 0, %s47
      %s62 = sphi 0, %s48
      %s68 = sphi 0, %s70
      %s71 = sphi 0, %s68
      %s72 = sphi 0, %s71
      %s88 = sphi 0, %s72
    $region4: #{tpu_custom_call.1} parent=1 // loop_header_branch
      %14 = sbr.rel (%p12) target = $region8
    $region5: #{tpu_custom_call.1} parent=1 // loop_body
      %s16 = ssub.s32 %s11, 1
      %s17 = ssub.s32 %s11, 2
      %s18 = sadd.s32 %s11, 1
      %s19 = ssub.s32 %s11, %s18
      %p20 = scmp.eq.s32.totalorder %s19, 0
      %s22 = sadd.s32 %s21, 1
      %s23 = scalar_select %p20, %s21, %s22
      %p26 = pneg %p20
      %p27 = scmp.eq.s32.totalorder %s11, 1
      %p28 = por %p26, %p27
      %p29 = scmp.ne.s32.totalorder %s21, %s24
      %p30 = scmp.eq.s32.totalorder %s11, 0
      %p31 = por %p29, %p30
      %p32 = scmp.ne.s32.totalorder %s21, %s24
      %p33 = scmp.eq.s32.totalorder %s16, 1
      %p34 = por %p32, %p33
      %p35 = scmp.ne.s32.totalorder %s24, %s25
      %p36 = scmp.eq.s32.totalorder %s16, 0
      %p37 = por %p35, %p36
      %p38 = scmp.ne.s32.totalorder %s24, %s25
      %p39 = scmp.eq.s32.totalorder %s17, 1
      %p40 = por %p38, %p39
      %p42 = scmp.ne.s32.totalorder %s25, %s41
      %p43 = scmp.eq.s32.totalorder %s17, 0
      %p44 = por %p42, %p43
      %s46 = sadd.s32 %s45, 1
      %p49 = scmp.eq.s32.totalorder %s11, 1
      %p50 = scmp.ne.s32.totalorder %s45, %s47
      %p51 = scmp.eq.s32.totalorder %s11, 0
      %p52 = por %p50, %p51
      %p53 = scmp.ne.s32.totalorder %s45, %s47
      %p54 = scmp.eq.s32.totalorder %s16, 1
      %p55 = por %p53, %p54
      %p56 = scmp.ne.s32.totalorder %s47, %s48
      %p57 = scmp.eq.s32.totalorder %s16, 0
      %p58 = por %p56, %p57
      %p59 = scmp.ne.s32.totalorder %s47, %s48
      %p60 = scmp.eq.s32.totalorder %s17, 1
      %p61 = por %p59, %p60
      %p63 = scmp.ne.s32.totalorder %s48, %s62
      %p64 = scmp.eq.s32.totalorder %s17, 0
      %p65 = por %p63, %p64
      %s66 = ssub.s32 %s11, %s18
      %p67 = scmp.eq.s32.totalorder %s66, 0
      %s69 = sadd.s32 %s68, 1
      %s70 = scalar_select %p67, %s68, %s69
      %p73 = pneg %p67
      %p74 = scmp.eq.s32.totalorder %s11, 1
      %p75 = por %p73, %p74
      %p76 = scmp.ne.s32.totalorder %s68, %s71
      %p77 = scmp.eq.s32.totalorder %s11, 0
      %p78 = por %p76, %p77
      %p79 = scmp.ne.s32.totalorder %s68, %s71
      %p80 = scmp.eq.s32.totalorder %s16, 1
      %p81 = por %p79, %p80
      %p82 = scmp.ne.s32.totalorder %s71, %s72
      %p83 = scmp.eq.s32.totalorder %s16, 0
      %p84 = por %p82, %p83
      %p85 = scmp.ne.s32.totalorder %s71, %s72
      %p86 = scmp.eq.s32.totalorder %s17, 1
      %p87 = por %p85, %p86
      %p89 = scmp.ne.s32.totalorder %s72, %s88
      %p90 = scmp.eq.s32.totalorder %s17, 0
      %p91 = por %p89, %p90
      %p92 = scmp.le.s32.totalorder 1, %s11
      %p93 = scmp.lt.s32.totalorder %s11, 3
      %p94 = pnand %p92, %p93
      %p95 = pneg %p94
      // Predicated region
      $region9: #{tpu_custom_call.1} parent=5 // pred_check
        _
      $region10: #{tpu_custom_call.1} parent=5 // pred_check_branch
        %97 = sbr.rel (%p94) target = $region12
      $region11: #{tpu_custom_call.1} parent=5 // pred_region
        %s98 = ssub.s32 %s11, 1
        // Predicated region
        $region13: #{tpu_custom_call.1} parent=11 // pred_check
          %p99 = pneg %p58
        $region14: #{tpu_custom_call.1} parent=11 // pred_check_branch
          %101 = sbr.rel (%p99) target = $region16
        $region15: #{tpu_custom_call.1} parent=11 // pred_region
          _
        $region16: #{tpu_custom_call.1} parent=11 // pred_fallthru
          _
      $region12: #{tpu_custom_call.1} parent=5 // pred_fallthru
        _
      %p102 = scmp.lt.s32.totalorder %s11, 2
      // Predicated region
      $region17: #{tpu_custom_call.1} parent=5 // pred_check
        %p103 = pneg %p102
      $region18: #{tpu_custom_call.1} parent=5 // pred_check_branch
        %105 = sbr.rel (%p103) target = $region20
      $region19: #{tpu_custom_call.1} parent=5 // pred_region
        // Predicated region
        $region21: #{tpu_custom_call.1} parent=19 // pred_check
          %p106 = pneg %p31
        $region22: #{tpu_custom_call.1} parent=19 // pred_check_branch
          %108 = sbr.rel (%p106) target = $region24
        $region23: #{tpu_custom_call.1} parent=19 // pred_region
          %p109 = scmp.lt.s32.totalorder %s11, 1
          %s110 = scalar_select %p109, %s11, 1
          %s111 = smul.addr %s110, 8
          %s112 = scalar_lea.vmem %s0, %s111
        $region24: #{tpu_custom_call.1} parent=19 // pred_fallthru
          _
      $region20: #{tpu_custom_call.1} parent=5 // pred_fallthru
        _
      %p113 = scmp.le.s32.totalorder 1, %s11
      %p114 = scmp.lt.s32.totalorder %s11, 3
      %p115 = pnand %p113, %p114
      %p116 = pneg %p115
      // Predicated region
      $region25: #{tpu_custom_call.1} parent=5 // pred_check
        _
      $region26: #{tpu_custom_call.1} parent=5 // pred_check_branch
        %118 = sbr.rel (%p115) target = $region28
      $region27: #{tpu_custom_call.1} parent=5 // pred_region
        %s119 = ssub.s32 %s11, 1
        %p120 = scmp.lt.s32.totalorder %s16, 1
        %s121 = scalar_select %p120, %s16, 1
        %s122 = smul.addr %s121, 8
        %s123 = scalar_lea.vmem %s0, %s122
        %p124 = pneg %p37
        %p125 = pneg %p34
        %p126 = pneg %p58
        %p127 = pneg %p55
        %p128 = pneg %p84
        %p129 = pneg %p81
        %s130 = sand.u32 %s71, 1
        %s131 = scalar_lea.sflag [#allocation3], %s130
        %s132 = sand.u32 %s71, 1
        %s133 = smul.addr %s132, 8
        %s134 = scalar_lea.vmem [#allocation2], %s133
        %p135 = scmp.lt.s32.totalorder %s16, 1
        %s136 = scalar_select %p135, %s16, 1
        %s137 = smul.addr %s136, 8
        %s138 = scalar_lea.vmem %s0, %s137
        %v139 = vld [vmem:[%s1] sm:$0x1]
        %v140 = vld [vmem:[%s1 + $0x1] sm:$0x1]
        %v141 = vld [vmem:[%s138] sm:$0xff]
        %v142 = vld [vmem:[%s1 + $0x2] sm:$0xf]
        %vm143 = vcmask 31744
        %v145 = vsel %vm143, %v141, 0
        %vm147 = vcmask 1043456
        %v149 = vsel %vm147, %v142, 0
        %151 = vmatpush.msra.mxu0 0.0
        %152 = vmatpush.msra.mxu0 0.0
        %153 = vmatpush.msra.mxu0 0.0
        %154 = vmatpush.msra.mxu0 0.0
        %155 = vmatpush.msra.mxu0 0.0
        %156 = vmatpush.msra.mxu0 0.0
        %157 = vmatpush.msra.mxu0 0.0
        %158 = vmatpush.msra.mxu0 0.0
        %159 = vmatpush.msra.mxu0 0.0
        %160 = vmatpush.msra.mxu0 0.0
        %161 = vmatpush.msra.mxu0 0.0
        %162 = vmatpush.msra.mxu0 0.0
        %163 = vmatpush.msra.mxu0 0.0
        %164 = vmatpush.msra.mxu0 0.0
        %165 = vmatpush.msra.mxu0 0.0
        %v166 = vand.u32 %v149, 4294901760
        %167 = vmatpush.msra.mxu0 %v166
        %v168 = vand.u32 %v145, 4294901760
        %v169 = vsub.f32 %v145, %v168
        %v170 = vand.u32 %v169, 4294901760
        %v171 = vsub.f32 %v169, %v170
        %v172 = vand.u32 %v171, 4294901760
        %173 = vmatmul.f32.gmra.mxu0 %v172
        %v174 = vpop.f32.mrf.mxu0
        %v175 = vadd.f32 0.0, %v174
        %176 = vdwg.mxu0
        %177 = vmatpush.msra.mxu0 0.0
        %178 = vmatpush.msra.mxu0 0.0
        %179 = vmatpush.msra.mxu0 0.0
        %180 = vmatpush.msra.mxu0 0.0
        %181 = vmatpush.msra.mxu0 0.0
        %182 = vmatpush.msra.mxu0 0.0
        %183 = vmatpush.msra.mxu0 0.0
        %184 = vmatpush.msra.mxu0 0.0
        %185 = vmatpush.msra.mxu0 0.0
        %186 = vmatpush.msra.mxu0 0.0
        %187 = vmatpush.msra.mxu0 0.0
        %188 = vmatpush.msra.mxu0 0.0
        %189 = vmatpush.msra.mxu0 0.0
        %190 = vmatpush.msra.mxu0 0.0
        %191 = vmatpush.msra.mxu0 0.0
        %v192 = vand.u32 %v149, 4294901760
        %v193 = vsub.f32 %v149, %v192
        %v194 = vand.u32 %v193, 4294901760
        %v195 = vsub.f32 %v193, %v194
        %v196 = vand.u32 %v195, 4294901760
        %197 = vmatpush.msra.mxu0 %v196
        %v198 = vand.u32 %v145, 4294901760
        %199 = vmatmul.f32.gmra.mxu0 %v198
        %v200 = vpop.f32.mrf.mxu0
        %v201 = vadd.f32 %v175, %v200
        %202 = vdwg.mxu0
        %203 = vmatpush.msra.mxu0 0.0
        %204 = vmatpush.msra.mxu0 0.0
        %205 = vmatpush.msra.mxu0 0.0
        %206 = vmatpush.msra.mxu0 0.0
        %207 = vmatpush.msra.mxu0 0.0
        %208 = vmatpush.msra.mxu0 0.0
        %209 = vmatpush.msra.mxu0 0.0
        %210 = vmatpush.msra.mxu0 0.0
        %211 = vmatpush.msra.mxu0 0.0
        %212 = vmatpush.msra.mxu0 0.0
        %213 = vmatpush.msra.mxu0 0.0
        %214 = vmatpush.msra.mxu0 0.0
        %215 = vmatpush.msra.mxu0 0.0
        %216 = vmatpush.msra.mxu0 0.0
        %217 = vmatpush.msra.mxu0 0.0
        %v218 = vand.u32 %v149, 4294901760
        %v219 = vsub.f32 %v149, %v218
        %220 = vmatpush.msra.mxu0 %v219
        %v221 = vand.u32 %v145, 4294901760
        %v222 = vsub.f32 %v145, %v221
        %223 = vmatmul.f32.gmra.mxu0 %v222
        %v224 = vpop.f32.mrf.mxu0
        %v225 = vadd.f32 %v201, %v224
        %226 = vdwg.mxu0
        %227 = vmatpush.msra.mxu0 0.0
        %228 = vmatpush.msra.mxu0 0.0
        %229 = vmatpush.msra.mxu0 0.0
        %230 = vmatpush.msra.mxu0 0.0
        %231 = vmatpush.msra.mxu0 0.0
        %232 = vmatpush.msra.mxu0 0.0
        %233 = vmatpush.msra.mxu0 0.0
        %234 = vmatpush.msra.mxu0 0.0
        %235 = vmatpush.msra.mxu0 0.0
        %236 = vmatpush.msra.mxu0 0.0
        %237 = vmatpush.msra.mxu0 0.0
        %238 = vmatpush.msra.mxu0 0.0
        %239 = vmatpush.msra.mxu0 0.0
        %240 = vmatpush.msra.mxu0 0.0
        %241 = vmatpush.msra.mxu0 0.0
        %v242 = vand.u32 %v149, 4294901760
        %243 = vmatpush.msra.mxu0 %v242
        %v244 = vand.u32 %v145, 4294901760
        %v245 = vsub.f32 %v145, %v244
        %v246 = vand.u32 %v245, 4294901760
        %247 = vmatmul.f32.gmra.mxu0 %v246
        %v248 = vpop.f32.mrf.mxu0
        %v249 = vadd.f32 %v225, %v248
        %250 = vdwg.mxu0
        %251 = vmatpush.msra.mxu0 0.0
        %252 = vmatpush.msra.mxu0 0.0
        %253 = vmatpush.msra.mxu0 0.0
        %254 = vmatpush.msra.mxu0 0.0
        %255 = vmatpush.msra.mxu0 0.0
        %256 = vmatpush.msra.mxu0 0.0
        %257 = vmatpush.msra.mxu0 0.0
        %258 = vmatpush.msra.mxu0 0.0
        %259 = vmatpush.msra.mxu0 0.0
        %260 = vmatpush.msra.mxu0 0.0
        %261 = vmatpush.msra.mxu0 0.0
        %262 = vmatpush.msra.mxu0 0.0
        %263 = vmatpush.msra.mxu0 0.0
        %264 = vmatpush.msra.mxu0 0.0
        %265 = vmatpush.msra.mxu0 0.0
        %v266 = vand.u32 %v149, 4294901760
        %v267 = vsub.f32 %v149, %v266
        %v268 = vand.u32 %v267, 4294901760
        %269 = vmatpush.msra.mxu0 %v268
        %v270 = vand.u32 %v145, 4294901760
        %271 = vmatmul.f32.gmra.mxu0 %v270
        %v272 = vpop.f32.mrf.mxu0
        %v273 = vadd.f32 %v249, %v272
        %274 = vdwg.mxu0
        %275 = vmatpush.msra.mxu0 0.0
        %276 = vmatpush.msra.mxu0 0.0
        %277 = vmatpush.msra.mxu0 0.0
        %278 = vmatpush.msra.mxu0 0.0
        %279 = vmatpush.msra.mxu0 0.0
        %280 = vmatpush.msra.mxu0 0.0
        %281 = vmatpush.msra.mxu0 0.0
        %282 = vmatpush.msra.mxu0 0.0
        %283 = vmatpush.msra.mxu0 0.0
        %284 = vmatpush.msra.mxu0 0.0
        %285 = vmatpush.msra.mxu0 0.0
        %286 = vmatpush.msra.mxu0 0.0
        %287 = vmatpush.msra.mxu0 0.0
        %288 = vmatpush.msra.mxu0 0.0
        %289 = vmatpush.msra.mxu0 0.0
        %v290 = vand.u32 %v149, 4294901760
        %291 = vmatpush.msra.mxu0 %v290
        %v292 = vand.u32 %v145, 4294901760
        %293 = vmatmul.f32.gmra.mxu0 %v292
        %v294 = vpop.f32.mrf.mxu0
        %v295 = vadd.f32 %v273, %v294
        %296 = vdwg.mxu0
        %v297 = vperm.slane %v139, 0
        %v298 = vmul.f32 %v295, %v297
        %v299 = vperm.slane %v140, 0
        %v300 = vadd.f32 %v298, %v299
        %v301 = vand.u32 2147483647, %v300
        %vm302 = vcmp.le.f32.partialorder %v301, 0.7853982
        %vm303 = vcmp.lt.s32.totalorder %v300, 0
        %v304 = vand.u32 %v300, 2139095040
        %v305 = vshrl.u32 %v304, 23
        %v306 = vsub.s32 %v305, 127
        %v307 = vand.u32 2147483647, %v300
        %v308 = vand.u32 %v307, 8388607
        %v309 = vor.u32 %v308, 8388608
        %v310 = vsub.s32 0, %v309
        %v311 = vadd.s32 %v306, 1
        %vm312 = vcmp.gt.s32.totalorder %v311, 0
        %v313 = vsel %vm312, %v311, 0
        %v314 = vshrl.u32 %v313, 5
        %v315 = vand.u32 %v313, 31
        %v316 = vsub.s32 32, %v315
        %v317 = vshrl.u32 683565275, %v316
        %v318 = vshll.u32 683565275, %v315
        %v319 = vshrl.u32 2475754826, %v316
        %v320 = vor.u32 %v318, %v319
        %v321 = vshll.u32 2475754826, %v315
        %v322 = vshrl.u32 2131351028, %v316
        %v323 = vor.u32 %v321, %v322
        %v324 = vshll.u32 2131351028, %v315
        %v325 = vshrl.u32 2102212464, %v316
        %v326 = vor.u32 %v324, %v325
        %v327 = vshll.u32 2102212464, %v315
        %v328 = vshrl.u32 920167782, %v316
        %v329 = vor.u32 %v327, %v328
        %v330 = vshll.u32 920167782, %v315
        %v331 = vshrl.u32 1326507024, %v316
        %v332 = vor.u32 %v330, %v331
        %vm333 = vcmp.lt.s32.totalorder %v314, 1
        %vm334 = vcmp.lt.s32.totalorder %v314, 2
        %vm335 = vcmp.lt.s32.totalorder %v314, 3
        %vm336 = vcmp.lt.s32.totalorder %v314, 4
        %v337 = vsel %vm333, %v317, %v320
        %v338 = vsel %vm336, %v326, 2102212464
        %v339 = vsel %vm335, %v323, %v338
        %v340 = vsel %vm334, %v337, %v339
        %v341 = vsel %vm333, %v320, %v323
        %v342 = vsel %vm336, %v329, 920167782
        %v343 = vsel %vm335, %v326, %v342
        %v344 = vsel %vm334, %v341, %v343
        %v345 = vsel %vm333, %v323, %v326
        %v346 = vsel %vm336, %v332, 1326507024
        %v347 = vsel %vm335, %v329, %v346
        %v348 = vsel %vm334, %v345, %v347
        %v349 = vshll.u32 %v309, 8
        %v350 = vand.u32 %v349, 65535
        %v351 = vshrl.u32 %v349, 16
        %v352 = vand.u32 %v348, 65535
        %v353 = vshrl.u32 %v348, 16
        %v354 = vmul.u32 %v350, %v352
        %v355 = vmul.u32 %v350, %v353
        %v356 = vmul.u32 %v351, %v352
        %v357 = vmul.u32 %v351, %v353
        %v358 = vshll.u32 %v355, 16
        %v359 = vshrl.u32 %v355, 16
        %v360 = vshll.u32 %v356, 16
        %v361 = vshrl.u32 %v356, 16
        %vm362 = vc.u32 %v354, %v358
        %v363 = vsel %vm362, 1, 0
        %v364 = vadd.s32 %v354, %v358
        %v365 = vadd.s32 %v357, %v363
        %vm366 = vc.u32 %v364, %v360
        %v367 = vsel %vm366, 1, 0
        %v368 = vadd.s32 %v364, %v360
        %v369 = vadd.s32 %v365, %v367
        %v370 = vadd.s32 %v369, %v359
        %v371 = vadd.s32 %v370, %v361
        %v372 = vand.u32 %v349, 65535
        %v373 = vshrl.u32 %v349, 16
        %v374 = vand.u32 %v344, 65535
        %v375 = vshrl.u32 %v344, 16
        %v376 = vmul.u32 %v372, %v374
        %v377 = vmul.u32 %v372, %v375
        %v378 = vmul.u32 %v373, %v374
        %v379 = vmul.u32 %v373, %v375
        %v380 = vshll.u32 %v377, 16
        %v381 = vshrl.u32 %v377, 16
        %v382 = vshll.u32 %v378, 16
        %v383 = vshrl.u32 %v378, 16
        %vm384 = vc.u32 %v376, %v380
        %v385 = vsel %vm384, 1, 0
        %v386 = vadd.s32 %v376, %v380
        %v387 = vadd.s32 %v379, %v385
        %vm388 = vc.u32 %v386, %v382
        %v389 = vsel %vm388, 1, 0
        %v390 = vadd.s32 %v386, %v382
        %v391 = vadd.s32 %v387, %v389
        %v392 = vadd.s32 %v391, %v381
        %v393 = vadd.s32 %v392, %v383
        %v394 = vmul.u32 %v349, %v340
        %v395 = vadd.s32 %v371, %v390
        %vm396 = vc.u32 %v371, %v390
        %v397 = vadd.s32 %v393, 1
        %v398 = vsel %vm396, %v397, %v393
        %v399 = vadd.s32 %v394, %v398
        %v400 = vadd.s32 %v399, 536870912
        %v401 = vshrl.u32 %v400, 30
        %v402 = vshll.u32 %v401, 30
        %v403 = vsub.s32 %v399, %v402
        %vm404 = vcmp.lt.s32.totalorder %v403, 0
        %v405 = vsub.s32 0, %v403
        %v406 = vsel %vm404, %v405, %v403
        %v407 = vclz %v406
        %v408 = vsub.s32 %v407, 2
        %vm409 = vcmp.gt.s32.totalorder 0, %v408
        %v410 = vsel %vm409, 0, %v408
        %v411 = vsub.s32 32, %v410
        %v412 = vshll.u32 %v403, %v410
        %v413 = vshrl.u32 %v395, %v411
        %v414 = vor.u32 %v412, %v413
        %v415 = vsub.s32 4294967266, %v410
        %v416 = vadd.s32 %v415, 127
        %v417 = vshll.u32 %v416, 23
        %v418 = vor.u32 4788187, %v417
        %v419 = vand.u32 2147483647, %v418
        %v421 = vcvt.s32.f32 %v414
        %v422 = vmul.f32 %v421, %v419
        %v423 = vxor.u32 %v422, 2147483648
        %v424 = vsel %vm303, %v423, %v422
        %v425 = vsub.s32 4, %v401
        %v426 = vsel %vm303, %v425, %v401
        %v427 = vsel %vm302, %v300, %v424
        %v428 = vsel %vm302, 0, %v426
        %v429 = vmul.f32 %v427, %v427
        %v430 = vmul.f32 %v429, -0.001358992
        %v431 = vadd.f32 %v430, 0.041655596
        %v432 = vmul.f32 %v429, %v431
        %v433 = vadd.f32 %v432, -0.4999988
        %v434 = vmul.f32 %v429, %v433
        %v435 = vadd.f32 1.0, %v434
        %v436 = vmul.f32 %v427, %v427
        %v437 = vmul.f32 %v436, -0.00019511016
        %v438 = vadd.f32 %v437, 0.008332121
        %v439 = vmul.f32 %v436, %v438
        %v440 = vadd.f32 %v439, -0.16666654
        %v441 = vmul.f32 %v436, %v440
        %v442 = vadd.f32 %v441, 1.0
        %v443 = vmul.f32 %v442, %v427
        %vm444 = vweird.f32 %v300
        %v445 = vadd.s32 %v428, 3
        %v446 = vand.u32 %v445, 3
        %vm447 = vcmp.lt.s32.totalorder %v446, 2
        %vm448 = vcmp.eq.s32.totalorder %v446, 0
        %v449 = vxor.u32 %v443, 2147483648
        %v450 = vsel %vm448, %v435, %v449
        %vm451 = vcmp.eq.s32.totalorder %v446, 2
        %v452 = vxor.u32 %v435, 2147483648
        %v453 = vsel %vm451, %v452, %v443
        %v454 = vsel %vm447, %v450, %v453
        %v455 = vsel %vm444, nan, %v454
        %456 = vst [vmem:[%s134] sm:$0xff] %v455
        %s457 = sand.u32 %s71, 1
        %s458 = scalar_lea.sflag [#allocation3], %s457
        %s459 = sand.u32 %s71, 1
        %s460 = smul.addr %s459, 8
        %s461 = scalar_lea.vmem [#allocation2], %s460
        // Predicated region
        $region29: #{tpu_custom_call.1} parent=27 // pred_check
          %p462 = pneg %p81
        $region30: #{tpu_custom_call.1} parent=27 // pred_check_branch
          %464 = sbr.rel (%p462) target = $region32
        $region31: #{tpu_custom_call.1} parent=27 // pred_region
          %466 = vsyncadd %s458, 0
          %s467 = smul.addr %s16, 8
          %s468 = scalar_lea.hbm %s2, %s467
          %s470 = sshll.u32 %s461, 4
          %s471 = int_to_ptr.vmem [resolvable:$true] %s470
          %s472 = sshll.u32 %s468, 4
          %s473 = int_to_ptr.hbm [resolvable:$true] %s472
          %475 = dma.vmem_to_hbm [thread:$0]  %s471, 128, %s473, %s458
        $region32: #{tpu_custom_call.1} parent=27 // pred_fallthru
          _
      $region28: #{tpu_custom_call.1} parent=5 // pred_fallthru
        _
      %p476 = scmp.le.s32.totalorder 2, %s11
      // Predicated region
      $region33: #{tpu_custom_call.1} parent=5 // pred_check
        %p477 = pneg %p476
      $region34: #{tpu_custom_call.1} parent=5 // pred_check_branch
        %479 = sbr.rel (%p477) target = $region36
      $region35: #{tpu_custom_call.1} parent=5 // pred_region
        %s480 = ssub.s32 %s11, 2
        // Predicated region
        $region37: #{tpu_custom_call.1} parent=35 // pred_check
          %p481 = pneg %p87
        $region38: #{tpu_custom_call.1} parent=35 // pred_check_branch
          %483 = sbr.rel (%p481) target = $region40
        $region39: #{tpu_custom_call.1} parent=35 // pred_region
          %s484 = sand.u32 %s72, 1
          %s485 = scalar_lea.sflag [#allocation3], %s484
          %s486 = sand.u32 %s72, 1
          %s487 = smul.addr %s486, 8
          %s488 = scalar_lea.vmem [#allocation2], %s487
          %490 = dma.done %s485, 128
        $region40: #{tpu_custom_call.1} parent=35 // pred_fallthru
          _
      $region36: #{tpu_custom_call.1} parent=5 // pred_fallthru
        _
    $region6: #{tpu_custom_call.1} parent=1 // loop_footer
      %s15 = sadd.s32 1, %s11
    $region7: #{tpu_custom_call.1} parent=1 // loop_footer_branch
      %10 = sbr.rel target = $region3
    $region8: #{tpu_custom_call.1} parent=1 // loop_exit
      _
    %491 = vsyncpa [#allocation3], 1
    %s492 = scalar_lea.sflag [#allocation3], 1
    %493 = vsyncpa %s492, 1

</llo_original>
